<compile_context>
chip_gen: v7x
topology: tpu7x:2x2x1
jax: 0.10.0
libtpu: 0.0.40
codegen_flags: <defaults>
</compile_context>

<pallas_src>
import functools

import jax
import jax.numpy as jnp
from jax import lax
from jax.experimental import pallas as pl
from jax.experimental.pallas import tpu as pltpu

_LANES = 128
_SENTINEL = 2.0                      # gt_prob marker for ignore_index / padded pixels
_VMEM_LIMIT = 32 * 1024 * 1024       # explicit scoped-VMEM limit (raises v5e's 16 MiB default)


def _round_up(x, m):
    return ((x + m - 1) // m) * m


def _pick_lane_tile(n, cap):
    """Largest multiple of 128 that divides n and is <= cap (n is a multiple of 128)."""
    cap = max(_LANES, min(cap, n))
    cap = (cap // _LANES) * _LANES
    t = cap
    while t > _LANES:
        if n % t == 0:
            return t
        t -= _LANES
    return _LANES


# -----------------------------------------------------------------------------
# Kernel 1: per-pixel softmax stats in (C, pixels) layout.
#   logits block: (1, C, TP)  classes on sublanes, pixels on lanes
#   labels block: (1, 1, TP)
#   outputs     : gt_prob (sentinel 2.0 for ignored/padded) and nll*valid, (1,1,TP)
# -----------------------------------------------------------------------------
def _ohem_stats_kernel(logits_ref, labels_ref, gtp_ref, nllm_ref, *, ignore_index):
    x = logits_ref[0].astype(jnp.float32)            # (C, TP), upcast per-tile
    lbl = labels_ref[0]                              # (1, TP) int32
    valid = lbl != ignore_index
    lbl_safe = jnp.where(valid, lbl, 0)

    # numerically-stable log-softmax over the class (sublane) axis
    m = jnp.max(x, axis=0, keepdims=True)
    lse = m + jnp.log(jnp.sum(jnp.exp(x - m), axis=0, keepdims=True))

    # gather the ground-truth-class logit via a one-hot masked reduction
    row = lax.broadcasted_iota(jnp.int32, x.shape, 0)
    onehot = row == lbl_safe
    gt_logit = jnp.sum(jnp.where(onehot, x, 0.0), axis=0, keepdims=True)

    gt_prob = jnp.exp(gt_logit - lse)
    nll = lse - gt_logit

    # sentinel 2.0 sorts above every real prob (<= 1.0) and marks invalid pixels;
    # nll is masked at the source so NaN/Inf logits at ignored pixels cannot leak.
    gtp_ref[0] = jnp.where(valid, gt_prob, jnp.float32(_SENTINEL))
    nllm_ref[0] = jnp.where(valid, nll, 0.0)


def _ohem_stats(logits, labels, ignore_index, tp):
    b, c, n = logits.shape
    kernel = functools.partial(_ohem_stats_kernel, ignore_index=ignore_index)
    px_spec = pl.BlockSpec((1, 1, tp), lambda bi, pi: (bi, 0, pi))
    return pl.pallas_call(
        kernel,
        out_shape=(
            jax.ShapeDtypeStruct((b, 1, n), jnp.float32),
            jax.ShapeDtypeStruct((b, 1, n), jnp.float32),
        ),
        grid_spec=pltpu.PrefetchScalarGridSpec(
            num_scalar_prefetch=0,
            grid=(b, n // tp),
            in_specs=[
                pl.BlockSpec((1, c, tp), lambda bi, pi: (bi, 0, pi)),
                px_spec,
            ],
            out_specs=[px_spec, px_spec],
        ),
        compiler_params=pltpu.CompilerParams(
            dimension_semantics=("parallel", "parallel"),
            vmem_limit_bytes=_VMEM_LIMIT),
    )(logits, labels)


# -----------------------------------------------------------------------------
# Exact k-th-smallest gt_prob via an 8-pass, 4-bit Pallas radix select (no top_k).
# Each pass: 16-bin histogram of the next digit among elements matching the prefix.
# -----------------------------------------------------------------------------
def _radix_hist_kernel(prefix_ref, gtp_ref, *hist_refs, shift, is_first):
    @pl.when(pl.program_id(0) == 0)
    def _():
        for r in hist_refs:
            r[...] = jnp.zeros_like(r)

    # gt_prob >= 0, so the int32 bitcast is monotone in the float value.
    keys = pltpu.bitcast(gtp_ref[...], jnp.int32)             # (8, TS)
    digit = jnp.bitwise_and(jnp.right_shift(keys, shift), 15)
    if is_first:
        match = None
    else:
        match = jnp.right_shift(keys, shift + 4) == prefix_ref[0]
    for d in range(16):
        sel = digit == d
        if match is not None:
            sel = jnp.logical_and(sel, match)
        hist_refs[d][...] += jnp.sum(sel.astype(jnp.int32))


def _radix_hist(gtp_view, prefix_arr, *, shift, is_first, ts):
    _, nl = gtp_view.shape
    nt = nl // ts
    kernel = functools.partial(_radix_hist_kernel, shift=shift, is_first=is_first)
    bin_shape = jax.ShapeDtypeStruct((1, 1), jnp.int32)
    bin_spec = pl.BlockSpec((1, 1), lambda j, pref: (0, 0))
    return pl.pallas_call(
        kernel,
        out_shape=(bin_shape,) * 16,
        grid_spec=pltpu.PrefetchScalarGridSpec(
            num_scalar_prefetch=1,
            grid=(nt,),
            in_specs=[pl.BlockSpec((8, ts), lambda j, pref: (0, j))],
            out_specs=[bin_spec] * 16,
        ),
        compiler_params=pltpu.CompilerParams(
            dimension_semantics=("arbitrary",),
            vmem_limit_bytes=_VMEM_LIMIT),
    )(prefix_arr, gtp_view)


def _kth_smallest_prob(gtp_view, k):
    """Exact (bit-exact) k-th smallest of the gt_prob slab.  Sentinel entries (2.0)
    sort above every real probability, so they never win whenever k <= num_valid —
    the only case in which the result is actually used."""
    _, nl = gtp_view.shape
    ts = _pick_lane_tile(nl, 8192)
    prefix = jnp.zeros((1,), jnp.int32)
    k_rem = jnp.int32(k)
    for pidx in range(8):                      # 8 passes x 4 bits = full 32-bit key
        shift = 28 - 4 * pidx                  # static per pass
        hists = _radix_hist(gtp_view, prefix, shift=shift,
                            is_first=(pidx == 0), ts=ts)
        hist = jnp.stack([h[0, 0] for h in hists])            # (16,) int32
        cum = jnp.cumsum(hist)
        dsel = jnp.argmax(cum >= k_rem)                        # first bin reaching k_rem
        k_rem = k_rem - (cum[dsel] - hist[dsel])
        prefix = (prefix * 16 + dsel).astype(jnp.int32)
    return lax.bitcast_convert_type(prefix[0], jnp.float32)


# -----------------------------------------------------------------------------
# Kernel 2: fused kept-mask + masked-sum reduction over the (8, N/8) lane-dense view.
#   sum_all  = sum(nll_masked)        cnt_all  = sum(valid)
#   sum_ohem = sum(nll_masked * keep) cnt_ohem = sum(keep),  keep = valid & (p <= thr)
# Per-core resident (1,1,TL) per-lane accumulators; tiny final sum in the wrapper.
# -----------------------------------------------------------------------------
def _ohem_reduce_kernel(thr_ref, gtp_ref, nll_ref, sa_ref, ca_ref, so_ref, co_ref):
    @pl.when(pl.program_id(1) == 0)
    def _():
        sa_ref[...] = jnp.zeros_like(sa_ref)
        ca_ref[...] = jnp.zeros_like(ca_ref)
        so_ref[...] = jnp.zeros_like(so_ref)
        co_ref[...] = jnp.zeros_like(co_ref)

    thr = thr_ref[0]
    gtp = gtp_ref[...]                               # (8, TL)
    nll = nll_ref[...]                               # (8, TL), already masked by valid
    valid = (gtp < 1.5).astype(jnp.float32)          # sentinel 2.0 -> invalid/padded
    keep = valid * (gtp <= thr).astype(jnp.float32)

    sa_ref[0] = sa_ref[0] + jnp.sum(nll, axis=0, keepdims=True)
    ca_ref[0] = ca_ref[0] + jnp.sum(valid, axis=0, keepdims=True)
    so_ref[0] = so_ref[0] + jnp.sum(nll * keep, axis=0, keepdims=True)
    co_ref[0] = co_ref[0] + jnp.sum(keep, axis=0, keepdims=True)


def _ohem_reduce(thr_arr, gtp_view, nll_view):
    _, nl = gtp_view.shape
    tl = _pick_lane_tile(nl, 16384)
    nbtot = nl // tl
    g = 2 if nbtot % 2 == 0 else 1                   # 2-way "parallel" axis for v7x megacore
    nb = nbtot // g
    data_spec = pl.BlockSpec((8, tl), lambda gi, j, thr_ref: (0, gi * nb + j))
    acc_spec = pl.BlockSpec((1, 1, tl), lambda gi, j, thr_ref: (gi, 0, 0))
    acc_shape = jax.ShapeDtypeStruct((g, 1, tl), jnp.float32)
    return pl.pallas_call(
        _ohem_reduce_kernel,
        out_shape=(acc_shape,) * 4,
        grid_spec=pltpu.PrefetchScalarGridSpec(
            num_scalar_prefetch=1,
            grid=(g, nb),
            in_specs=[data_spec, data_spec],
            out_specs=[acc_spec] * 4,
        ),
        compiler_params=pltpu.CompilerParams(
            dimension_semantics=("parallel", "arbitrary"),
            vmem_limit_bytes=_VMEM_LIMIT),
    )(thr_arr, gtp_view, nll_view)


# -----------------------------------------------------------------------------
# OhemCrossEntropy2dTensor.forward equivalent
# -----------------------------------------------------------------------------
def ohem_cross_entropy_2d(pred_nchw, target_bhw, *, ignore_index=255, thresh=0.7,
                          min_kept=256, pixel_tile=16384):
    b, c, h, w = pred_nchw.shape
    hw = h * w
    n_true = b * hw

    # pixels-on-lanes layout: free reshape of NCHW (no transpose), native dtype logits.
    logits = pred_nchw.reshape(b, c, hw)
    labels = target_bhw.reshape(b, 1, hw).astype(jnp.int32)

    # Pixel tile: big (default 16384), multiple of 1024 so the (8, N/8) reduce/select
    # views are free reshapes; capped by a double-buffered-logits VMEM budget.
    bytes_per_px = 2 * c * jnp.dtype(logits.dtype).itemsize      # x2 pipeline buffers
    tp_cap = max(1024, (12 * 1024 * 1024 // max(1, bytes_per_px)) // 1024 * 1024)
    tp = max(1024, min(int(pixel_tile), tp_cap) // 1024 * 1024)
    tp = min(tp, _round_up(hw, 1024))
    hw_pad = _round_up(hw, tp)
    if hw_pad != hw:
        logits = jnp.pad(logits, ((0, 0), (0, 0), (0, hw_pad - hw)))
        labels = jnp.pad(labels, ((0, 0), (0, 0), (0, hw_pad - hw)),
                         constant_values=ignore_index)

    gt_prob, nll_masked = _ohem_stats(logits, labels, ignore_index, tp)

    # Free, contiguous reshapes to the lane-dense (8, N/8) view used by the radix
    # select and the reduction kernel (full sublane + lane utilization for any batch).
    nl = (b * hw_pad) // 8
    gtp_v = gt_prob.reshape(8, nl)
    nll_v = nll_masked.reshape(8, nl)

    # ---- OHEM threshold = max(thresh, exact k-th smallest gt-probability) ---------
    if min_kept > 0:
        kk = min(n_true, int(min_kept))
        kth = _kth_smallest_prob(gtp_v, kk)
        threshold = jnp.maximum(kth, jnp.float32(thresh))
    else:
        threshold = jnp.float32(thresh)
    thr_arr = jnp.full((1,), threshold, dtype=jnp.float32)

    # ---- fused kept-mask + masked-sum reduction ------------------------------------
    sa, ca, so, co = _ohem_reduce(thr_arr, gtp_v, nll_v)
    sum_all, cnt_all = jnp.sum(sa), jnp.sum(ca)
    sum_ohem, cnt_ohem = jnp.sum(so), jnp.sum(co)

    # PyTorch: if min_kept > num_valid -> keep all valid; elif num_valid > 0 -> OHEM.
    if min_kept > 0:
        do_ohem = jnp.logical_and(cnt_all >= jnp.float32(min_kept), cnt_all > 0)
    else:
        do_ohem = jnp.array(False)     # min_kept == 0: OHEM filter is never applied
    loss_sum = jnp.where(do_ohem, sum_ohem, sum_all)
    loss_cnt = jnp.where(do_ohem, cnt_ohem, cnt_all)
    # CrossEntropyLoss(reduction='mean', ignore_index) == sum over kept / #kept.
    # All-ignored case: PyTorch would yield NaN; return 0 instead (documented diff).
    return jnp.where(loss_cnt > 0, loss_sum / jnp.maximum(loss_cnt, 1.0), 0.0)


# -----------------------------------------------------------------------------
# CriterionOhem equivalent
# -----------------------------------------------------------------------------
class CriterionOhemPallas:
    def __init__(self, aux_weight, thresh=0.7, min_kept=100000, ignore_index=255,
                 use_weight=False, pixel_tile=16384):
        # TODO(synk): use_weight=True (per-class weighted CE) not implemented here;
        # CriterionOhem's default is use_weight=False.
        assert not use_weight
        self._aux_weight = float(aux_weight)
        self._thresh = float(thresh)
        self._min_kept = int(min_kept)
        self._ignore_index = int(ignore_index)
        self._pixel_tile = int(pixel_tile)

    def _one(self, pred, target):
        return ohem_cross_entropy_2d(
            pred, target, ignore_index=self._ignore_index, thresh=self._thresh,
            min_kept=self._min_kept, pixel_tile=self._pixel_tile)

    def __call__(self, preds, target):
        h, w = target.shape[1], target.shape[2]
        if self._aux_weight > 0:
            main_pred, aux_pred = preds
            assert main_pred.shape[2:] == (h, w) and aux_pred.shape[2:] == (h, w)
            return (self._one(main_pred, target)
                    + self._aux_weight * self._one(aux_pred, target))
        assert preds.shape[2:] == (h, w)
        return self._one(preds, target)


# -----------------------------------------------------------------------------
# Pure-JAX reference (correctness check only)
# -----------------------------------------------------------------------------
def _ohem_ce_ref(pred, target, ignore_index, thresh, min_kept):
    b, c, h, w = pred.shape
    tgt = target.reshape(-1)
    valid = tgt != ignore_index
    tgt0 = jnp.where(valid, tgt, 0)
    logits = jnp.transpose(pred, (0, 2, 3, 1)).reshape(-1, c).astype(jnp.float32)
    logp = jax.nn.log_softmax(logits, axis=-1)
    gt_logp = jnp.take_along_axis(logp, tgt0[:, None], axis=-1)[:, 0]
    gt_prob = jnp.where(valid, jnp.exp(gt_logp), 1.0)
    n = gt_prob.shape[0]
    num_valid = jnp.sum(valid)
    k = min(n, int(min_kept)) - 1
    thr_val = jnp.sort(gt_prob)[k]
    threshold = jnp.where(thr_val > thresh, thr_val, jnp.float32(thresh))
    kept_ohem = jnp.logical_and(valid, gt_prob <= threshold)
    do_ohem = jnp.logical_and(num_valid >= min_kept, num_valid > 0)
    kept = jnp.where(do_ohem, kept_ohem, valid).astype(jnp.float32)
    return jnp.sum(-gt_logp * kept) / jnp.sum(kept)


if __name__ == "__main__":
    key = jax.random.PRNGKey(0)
    k1, k2, k3, k4 = jax.random.split(key, 4)

    # Small shapes consistent with the module: NCHW preds, (b, h, w) integer target.
    B, C, H, W = 2, 19, 16, 16
    IGNORE = 255

    main_pred = jax.random.normal(k1, (B, C, H, W), dtype=jnp.float32)
    aux_pred = jax.random.normal(k2, (B, C, H, W), dtype=jnp.float32)
    target = jax.random.randint(k3, (B, H, W), 0, C, dtype=jnp.int32)
    ignore_mask = jax.random.bernoulli(k4, 0.1, (B, H, W))
    target = jnp.where(ignore_mask, IGNORE, target)

    # 1) module defaults: min_kept (100000) > num_valid -> keep-all-valid branch,
    #    single-pred path (aux_weight = 0).
    crit_default = CriterionOhemPallas(0.0, thresh=0.7, min_kept=100000,
                                       ignore_index=IGNORE)
    loss_a = jax.block_until_ready(crit_default(main_pred, target))
    ref_a = _ohem_ce_ref(main_pred, target, IGNORE, 0.7, 100000)

    # 2) aux head + tiny thresh so the exact k-th-smallest (radix select) decides.
    crit_ohem = CriterionOhemPallas(0.4, thresh=0.001, min_kept=64,
                                    ignore_index=IGNORE)
    loss_b = jax.block_until_ready(crit_ohem((main_pred, aux_pred), target))
    ref_b = (_ohem_ce_ref(main_pred, target, IGNORE, 0.001, 64)
             + 0.4 * _ohem_ce_ref(aux_pred, target, IGNORE, 0.001, 64))

    assert jnp.isfinite(loss_a) and jnp.isfinite(loss_b)
    assert abs(float(loss_a) - float(ref_a)) < 5e-4, (float(loss_a), float(ref_a))
    assert abs(float(loss_b) - float(ref_b)) < 5e-4, (float(loss_b), float(ref_b))

    print("KERNEL_OK")
</pallas_src>

<mosaic_0001>
module attributes {stable_mosaic.version = 11 : i64} {
  func.func @_ohem_stats_kernel(%arg0: i32, %arg1: i32, %arg2: memref<1x19x1024xf32, #tpu.memory_space<vmem>>, %arg3: memref<1x1x1024xi32, #tpu.memory_space<vmem>>, %arg4: memref<1x1x1024xf32, #tpu.memory_space<vmem>>, %arg5: memref<1x1x1024xf32, #tpu.memory_space<vmem>>) attributes {dimension_semantics = [#tpu.dimension_semantics<parallel>, #tpu.dimension_semantics<parallel>], iteration_bounds = array<i64: 2, 1>, scalar_prefetch = 0 : i64, scratch_operands = 0 : i64, tpu.core_type = #tpu.core_type<tc>, window_params = [{transform_indices = @transform_0, window_bounds = array<i64: 1, 19, 1024>}, {transform_indices = @transform_1, window_bounds = array<i64: 1, 1, 1024>}, {transform_indices = @transform_2, window_bounds = array<i64: 1, 1, 1024>}, {transform_indices = @transform_3, window_bounds = array<i64: 1, 1, 1024>}]} {
    %c0 = arith.constant 0 : index
    %c0_0 = arith.constant 0 : index
    %c0_1 = arith.constant 0 : index
    %0 = vector.load %arg2[%c0, %c0_0, %c0_1] : memref<1x19x1024xf32, #tpu.memory_space<vmem>>, vector<1x19x1024xf32>
    %1 = vector.shape_cast %0 : vector<1x19x1024xf32> to vector<19x1024xf32>
    %c0_2 = arith.constant 0 : index
    %c0_3 = arith.constant 0 : index
    %c0_4 = arith.constant 0 : index
    %2 = vector.load %arg3[%c0_2, %c0_3, %c0_4] : memref<1x1x1024xi32, #tpu.memory_space<vmem>>, vector<1x1x1024xi32>
    %3 = vector.shape_cast %2 : vector<1x1x1024xi32> to vector<1x1024xi32>
    %c255_i32 = arith.constant 255 : i32
    %4 = vector.broadcast %c255_i32 : i32 to vector<1x1024xi32>
    %5 = arith.cmpi ne, %3, %4 : vector<1x1024xi32>
    %c0_i32 = arith.constant 0 : i32
    %6 = vector.broadcast %c0_i32 : i32 to vector<1x1024xi32>
    %7 = arith.select %5, %3, %6 : vector<1x1024xi1>, vector<1x1024xi32>
    %cst = arith.constant dense<0xFF800000> : vector<1024xf32>
    %8 = vector.multi_reduction <maximumf>, %1, %cst [0] : vector<19x1024xf32> to vector<1024xf32>
    %9 = vector.shape_cast %8 : vector<1024xf32> to vector<1x1024xf32>
    %10 = vector.broadcast %9 : vector<1x1024xf32> to vector<19x1024xf32>
    %11 = arith.subf %1, %10 : vector<19x1024xf32>
    %12 = math.exp %11 : vector<19x1024xf32>
    %cst_5 = arith.constant dense<0.000000e+00> : vector<1024xf32>
    %13 = vector.multi_reduction <add>, %12, %cst_5 [0] : vector<19x1024xf32> to vector<1024xf32>
    %14 = vector.shape_cast %13 : vector<1024xf32> to vector<1x1024xf32>
    %15 = math.log %14 : vector<1x1024xf32>
    %16 = arith.addf %9, %15 : vector<1x1024xf32>
    %17 = tpu.iota {dimensions = array<i32: 0>} : vector<19x1024xi32>
    %18 = vector.broadcast %7 : vector<1x1024xi32> to vector<19x1024xi32>
    %19 = arith.cmpi eq, %17, %18 : vector<19x1024xi32>
    %cst_6 = arith.constant 0.000000e+00 : f32
    %20 = vector.broadcast %cst_6 : f32 to vector<19x1024xf32>
    %21 = arith.select %19, %1, %20 : vector<19x1024xi1>, vector<19x1024xf32>
    %cst_7 = arith.constant dense<0.000000e+00> : vector<1024xf32>
    %22 = vector.multi_reduction <add>, %21, %cst_7 [0] : vector<19x1024xf32> to vector<1024xf32>
    %23 = vector.shape_cast %22 : vector<1024xf32> to vector<1x1024xf32>
    %24 = arith.subf %23, %16 : vector<1x1024xf32>
    %25 = math.exp %24 : vector<1x1024xf32>
    %26 = arith.subf %16, %23 : vector<1x1024xf32>
    %cst_8 = arith.constant 2.000000e+00 : f32
    %27 = vector.broadcast %cst_8 : f32 to vector<1x1024xf32>
    %28 = arith.select %5, %25, %27 : vector<1x1024xi1>, vector<1x1024xf32>
    %c0_9 = arith.constant 0 : index
    %c0_10 = arith.constant 0 : index
    %c0_11 = arith.constant 0 : index
    %29 = vector.load %arg4[%c0_9, %c0_10, %c0_11] : memref<1x1x1024xf32, #tpu.memory_space<vmem>>, vector<1x1x1024xf32>
    %30 = vector.shape_cast %29 : vector<1x1x1024xf32> to vector<1x1024xf32>
    %31 = vector.shape_cast %28 : vector<1x1024xf32> to vector<1x1x1024xf32>
    tpu.vector_store %arg4[%c0_9, %c0_10, %c0_11], %31 {strides = array<i32>} : memref<1x1x1024xf32, #tpu.memory_space<vmem>>, vector<1x1x1024xf32>,
    %cst_12 = arith.constant 0.000000e+00 : f32
    %32 = vector.broadcast %cst_12 : f32 to vector<1x1024xf32>
    %33 = arith.select %5, %26, %32 : vector<1x1024xi1>, vector<1x1024xf32>
    %c0_13 = arith.constant 0 : index
    %c0_14 = arith.constant 0 : index
    %c0_15 = arith.constant 0 : index
    %34 = vector.load %arg5[%c0_13, %c0_14, %c0_15] : memref<1x1x1024xf32, #tpu.memory_space<vmem>>, vector<1x1x1024xf32>
    %35 = vector.shape_cast %34 : vector<1x1x1024xf32> to vector<1x1024xf32>
    %36 = vector.shape_cast %33 : vector<1x1024xf32> to vector<1x1x1024xf32>
    tpu.vector_store %arg5[%c0_13, %c0_14, %c0_15], %36 {strides = array<i32>} : memref<1x1x1024xf32, #tpu.memory_space<vmem>>, vector<1x1x1024xf32>,
    return
  }
  func.func @transform_0(%arg0: i32, %arg1: i32) -> (i32, i32, i32) {
    %c0_i32 = arith.constant 0 : i32
    %c0_i32_0 = arith.constant 0 : i32
    return %arg0, %c0_i32, %arg1 : i32, i32, i32
  }
  func.func @transform_1(%arg0: i32, %arg1: i32) -> (i32, i32, i32) {
    %c0_i32 = arith.constant 0 : i32
    %c0_i32_0 = arith.constant 0 : i32
    return %arg0, %c0_i32, %arg1 : i32, i32, i32
  }
  func.func @transform_2(%arg0: i32, %arg1: i32) -> (i32, i32, i32) {
    %c0_i32 = arith.constant 0 : i32
    %c0_i32_0 = arith.constant 0 : i32
    return %arg0, %c0_i32, %arg1 : i32, i32, i32
  }
  func.func @transform_3(%arg0: i32, %arg1: i32) -> (i32, i32, i32) {
    %c0_i32 = arith.constant 0 : i32
    %c0_i32_0 = arith.constant 0 : i32
    return %arg0, %c0_i32, %arg1 : i32, i32, i32
  }
}

</mosaic_0001>

<llo_original>
// kernel: tpu_custom_call.1
$region0: #{tpu_custom_call.1}
  #allocation0 [shape = 'u32[]', space=smem, size = 0x4, offset = 0x4, fixed_abs, tag = 'smem constant byte address 0x4 - core index']
  #allocation1 [shape = 'u32[144,128]{1,0:T(1,128)}', space=vmem, size = 0x12000, scoped, tag = 'internal scratch']
  %s0 = inlined_call_operand.vmem [shape: f32[2,19,1024], index: 0, kind: input, shape index: {}]
  %s1 = inlined_call_operand.vmem [shape: s32[2,1,1024], index: 1, kind: input, shape index: {}]
  %s2 = inlined_call_operand.hbm [shape: f32[2,1,1024], index: 2, kind: output, shape index: {0}]
  %s3 = inlined_call_operand.hbm [shape: f32[2,1,1024], index: 3, kind: output, shape index: {1}]
  %4 = xla_tuple %s2, %s3
  %s5 = sld [smem:[#allocation0]]
  $region49: #{tpu_custom_call.1} parent=0
    _
  %s7 = ssub.s32 1, %s5
  %s8 = scalar_select 0, %s7, %s5
  $region1: #{tpu_custom_call.1} parent=0
    #allocation2 [shape = 'u8[8192]{0}', space=vmem, size = 0x2000, scoped, tag = 'output window, operand 0']
    #allocation3 [shape = 's32[2]{0}', space=sflag, size = 0x8, scoped, tag = 'scoped memory for tpu_custom_call.1']
    #allocation4 [shape = 'u8[8192]{0}', space=vmem, size = 0x2000, scoped, tag = 'output window, operand 1']
    #allocation5 [shape = 's32[2]{0}', space=sflag, size = 0x8, scoped, tag = 'scoped memory for tpu_custom_call.1']
    %9 = vsyncpa [#allocation3], 0
    %s10 = scalar_lea.sflag [#allocation3], 1
    %11 = vsyncpa %s10, 0
    %12 = vsyncpa [#allocation5], 0
    %s13 = scalar_lea.sflag [#allocation5], 1
    %14 = vsyncpa %s13, 0
    loop: start=0, step=1, limit=4
    $region2: #{tpu_custom_call.1} parent=1 // loop_pre_header
      _
    $region3: #{tpu_custom_call.1} parent=1 // loop_header
      %s16 = sphi 0, %s20
      %p17 = scmp.ge.s32.totalorder %s16, 4
      %s23 = sphi 0, %s35
      %s24 = sphi 0, %s31
      %s25 = sphi 0, %s23
      %s26 = sphi 0, %s24
      %s27 = sphi 0, %s25
      %s28 = sphi 0, %s26
      %s40 = sphi 0, %s42
      %s43 = sphi 0, %s40
      %s44 = sphi 0, %s43
      %s60 = sphi 0, %s44
      %s68 = sphi 0, %s70
      %s71 = sphi 0, %s68
      %s72 = sphi 0, %s71
      %s88 = sphi 0, %s72
      %s96 = sphi 0, %s98
      %s99 = sphi 0, %s96
      %s100 = sphi 0, %s99
      %s116 = sphi 0, %s100
      %s124 = sphi 0, %s126
      %s127 = sphi 0, %s124
      %s128 = sphi 0, %s127
      %s144 = sphi 0, %s128
    $region4: #{tpu_custom_call.1} parent=1 // loop_header_branch
      %19 = sbr.rel (%p17) target = $region8
    $region5: #{tpu_custom_call.1} parent=1 // loop_body
      %s21 = ssub.s32 %s16, 1
      %s22 = ssub.s32 %s16, 2
      %s29 = sadd.s32 1, %s24
      %p30 = scmp.ge.s32.totalorder %s29, 1
      %s31 = scalar_select %p30, 0, %s29
      %s32 = sadd.s32 1, %s23
      %s33 = scalar_select %p30, %s32, %s23
      %p34 = scmp.ge.s32.totalorder %s33, 2
      %s35 = scalar_select %p34, 0, %s33
      %s36 = ssub.s32 %s23, %s35
      %s37 = ssub.s32 %s24, %s31
      %s38 = sor.u32 %s36, %s37
      %p39 = scmp.eq.s32.totalorder %s38, 0
      %s41 = sadd.s32 %s40, 1
      %s42 = scalar_select %p39, %s40, %s41
      %p45 = pneg %p39
      %p46 = scmp.eq.s32.totalorder %s16, 1
      %p47 = por %p45, %p46
      %p48 = scmp.ne.s32.totalorder %s40, %s43
      %p49 = scmp.eq.s32.totalorder %s16, 0
      %p50 = por %p48, %p49
      %p51 = scmp.ne.s32.totalorder %s40, %s43
      %p52 = scmp.eq.s32.totalorder %s21, 1
      %p53 = por %p51, %p52
      %p54 = scmp.ne.s32.totalorder %s43, %s44
      %p55 = scmp.eq.s32.totalorder %s21, 0
      %p56 = por %p54, %p55
      %p57 = scmp.ne.s32.totalorder %s43, %s44
      %p58 = scmp.eq.s32.totalorder %s22, 1
      %p59 = por %p57, %p58
      %p61 = scmp.ne.s32.totalorder %s44, %s60
      %p62 = scmp.eq.s32.totalorder %s22, 0
      %p63 = por %p61, %p62
      %s64 = ssub.s32 %s23, %s35
      %s65 = ssub.s32 %s24, %s31
      %s66 = sor.u32 %s64, %s65
      %p67 = scmp.eq.s32.totalorder %s66, 0
      %s69 = sadd.s32 %s68, 1
      %s70 = scalar_select %p67, %s68, %s69
      %p73 = pneg %p67
      %p74 = scmp.eq.s32.totalorder %s16, 1
      %p75 = por %p73, %p74
      %p76 = scmp.ne.s32.totalorder %s68, %s71
      %p77 = scmp.eq.s32.totalorder %s16, 0
      %p78 = por %p76, %p77
      %p79 = scmp.ne.s32.totalorder %s68, %s71
      %p80 = scmp.eq.s32.totalorder %s21, 1
      %p81 = por %p79, %p80
      %p82 = scmp.ne.s32.totalorder %s71, %s72
      %p83 = scmp.eq.s32.totalorder %s21, 0
      %p84 = por %p82, %p83
      %p85 = scmp.ne.s32.totalorder %s71, %s72
      %p86 = scmp.eq.s32.totalorder %s22, 1
      %p87 = por %p85, %p86
      %p89 = scmp.ne.s32.totalorder %s72, %s88
      %p90 = scmp.eq.s32.totalorder %s22, 0
      %p91 = por %p89, %p90
      %s92 = ssub.s32 %s23, %s35
      %s93 = ssub.s32 %s24, %s31
      %s94 = sor.u32 %s92, %s93
      %p95 = scmp.eq.s32.totalorder %s94, 0
      %s97 = sadd.s32 %s96, 1
      %s98 = scalar_select %p95, %s96, %s97
      %p101 = pneg %p95
      %p102 = scmp.eq.s32.totalorder %s16, 1
      %p103 = por %p101, %p102
      %p104 = scmp.ne.s32.totalorder %s96, %s99
      %p105 = scmp.eq.s32.totalorder %s16, 0
      %p106 = por %p104, %p105
      %p107 = scmp.ne.s32.totalorder %s96, %s99
      %p108 = scmp.eq.s32.totalorder %s21, 1
      %p109 = por %p107, %p108
      %p110 = scmp.ne.s32.totalorder %s99, %s100
      %p111 = scmp.eq.s32.totalorder %s21, 0
      %p112 = por %p110, %p111
      %p113 = scmp.ne.s32.totalorder %s99, %s100
      %p114 = scmp.eq.s32.totalorder %s22, 1
      %p115 = por %p113, %p114
      %p117 = scmp.ne.s32.totalorder %s100, %s116
      %p118 = scmp.eq.s32.totalorder %s22, 0
      %p119 = por %p117, %p118
      %s120 = ssub.s32 %s23, %s35
      %s121 = ssub.s32 %s24, %s31
      %s122 = sor.u32 %s120, %s121
      %p123 = scmp.eq.s32.totalorder %s122, 0
      %s125 = sadd.s32 %s124, 1
      %s126 = scalar_select %p123, %s124, %s125
      %p129 = pneg %p123
      %p130 = scmp.eq.s32.totalorder %s16, 1
      %p131 = por %p129, %p130
      %p132 = scmp.ne.s32.totalorder %s124, %s127
      %p133 = scmp.eq.s32.totalorder %s16, 0
      %p134 = por %p132, %p133
      %p135 = scmp.ne.s32.totalorder %s124, %s127
      %p136 = scmp.eq.s32.totalorder %s21, 1
      %p137 = por %p135, %p136
      %p138 = scmp.ne.s32.totalorder %s127, %s128
      %p139 = scmp.eq.s32.totalorder %s21, 0
      %p140 = por %p138, %p139
      %p141 = scmp.ne.s32.totalorder %s127, %s128
      %p142 = scmp.eq.s32.totalorder %s22, 1
      %p143 = por %p141, %p142
      %p145 = scmp.ne.s32.totalorder %s128, %s144
      %p146 = scmp.eq.s32.totalorder %s22, 0
      %p147 = por %p145, %p146
      %p148 = scmp.le.s32.totalorder 1, %s16
      %p149 = scmp.lt.s32.totalorder %s16, 3
      %p150 = pnand %p148, %p149
      %p151 = pneg %p150
      // Predicated region
      $region9: #{tpu_custom_call.1} parent=5 // pred_check
        _
      $region10: #{tpu_custom_call.1} parent=5 // pred_check_branch
        %153 = sbr.rel (%p150) target = $region12
      $region11: #{tpu_custom_call.1} parent=5 // pred_region
        %s154 = ssub.s32 %s16, 1
      $region12: #{tpu_custom_call.1} parent=5 // pred_fallthru
        _
      %p155 = scmp.lt.s32.totalorder %s16, 2
      // Predicated region
      $region13: #{tpu_custom_call.1} parent=5 // pred_check
        %p156 = pneg %p155
      $region14: #{tpu_custom_call.1} parent=5 // pred_check_branch
        %158 = sbr.rel (%p156) target = $region16
      $region15: #{tpu_custom_call.1} parent=5 // pred_region
        // Predicated region
        $region17: #{tpu_custom_call.1} parent=15 // pred_check
          %p159 = pneg %p50
        $region18: #{tpu_custom_call.1} parent=15 // pred_check_branch
          %161 = sbr.rel (%p159) target = $region20
        $region19: #{tpu_custom_call.1} parent=15 // pred_region
          %s162 = smul.u32 8, %s24
          %p163 = scmp.lt.s32.totalorder %s23, 1
          %s164 = scalar_select %p163, %s23, 1
          %p165 = scmp.lt.s32.totalorder %s162, 7
          %s166 = scalar_select %p165, %s162, 7
          %s167 = smul.addr %s164, 24
          %s168 = sadd.s32 %s166, %s167
          %s169 = smul.addr %s168, 8
          %s170 = scalar_lea.vmem %s0, %s169
          %s171 = smul.u32 8, %s24
        $region20: #{tpu_custom_call.1} parent=15 // pred_fallthru
          _
        // Predicated region
        $region21: #{tpu_custom_call.1} parent=15 // pred_check
          %p172 = pneg %p78
        $region22: #{tpu_custom_call.1} parent=15 // pred_check_branch
          %174 = sbr.rel (%p172) target = $region24
        $region23: #{tpu_custom_call.1} parent=15 // pred_region
          %s175 = smul.u32 8, %s24
          %p176 = scmp.lt.s32.totalorder %s23, 1
          %s177 = scalar_select %p176, %s23, 1
          %p178 = scmp.lt.s32.totalorder %s175, 7
          %s179 = scalar_select %p178, %s175, 7
          %s180 = smul.addr %s177, 8
          %s181 = sadd.s32 %s179, %s180
          %s182 = scalar_lea.vmem %s1, %s181
          %s183 = smul.u32 8, %s24
        $region24: #{tpu_custom_call.1} parent=15 // pred_fallthru
          _
      $region16: #{tpu_custom_call.1} parent=5 // pred_fallthru
        _
      %p184 = scmp.le.s32.totalorder 1, %s16
      %p185 = scmp.lt.s32.totalorder %s16, 3
      %p186 = pnand %p184, %p185
      %p187 = pneg %p186
      // Predicated region
      $region25: #{tpu_custom_call.1} parent=5 // pred_check
        _
      $region26: #{tpu_custom_call.1} parent=5 // pred_check_branch
        %189 = sbr.rel (%p186) target = $region28
      $region27: #{tpu_custom_call.1} parent=5 // pred_region
        %s190 = ssub.s32 %s16, 1
        %s191 = smul.u32 8, %s26
        %p192 = scmp.lt.s32.totalorder %s25, 1
        %s193 = scalar_select %p192, %s25, 1
        %p194 = scmp.lt.s32.totalorder %s191, 7
        %s195 = scalar_select %p194, %s191, 7
        %s196 = smul.addr %s193, 24
        %s197 = sadd.s32 %s195, %s196
        %s198 = smul.addr %s197, 8
        %s199 = scalar_lea.vmem %s0, %s198
        %p200 = pneg %p56
        %p201 = pneg %p53
        %s202 = smul.u32 8, %s26
        %p203 = scmp.lt.s32.totalorder %s25, 1
        %s204 = scalar_select %p203, %s25, 1
        %p205 = scmp.lt.s32.totalorder %s202, 7
        %s206 = scalar_select %p205, %s202, 7
        %s207 = smul.addr %s204, 8
        %s208 = sadd.s32 %s206, %s207
        %s209 = scalar_lea.vmem %s1, %s208
        %p210 = pneg %p84
        %p211 = pneg %p81
        %p212 = pneg %p112
        %p213 = pneg %p109
        %s214 = sand.u32 %s99, 1
        %s215 = scalar_lea.sflag [#allocation3], %s214
        %s216 = sand.u32 %s99, 1
        %s217 = smul.addr %s216, 8
        %s218 = scalar_lea.vmem [#allocation2], %s217
        %p219 = pneg %p140
        %p220 = pneg %p137
        %s221 = sand.u32 %s127, 1
        %s222 = scalar_lea.sflag [#allocation5], %s221
        %s223 = sand.u32 %s127, 1
        %s224 = smul.addr %s223, 8
        %s225 = scalar_lea.vmem [#allocation4], %s224
        %s226 = smul.u32 8, %s26
        %p227 = scmp.lt.s32.totalorder %s25, 1
        %s228 = scalar_select %p227, %s25, 1
        %p229 = scmp.lt.s32.totalorder %s226, 7
        %s230 = scalar_select %p229, %s226, 7
        %s231 = smul.addr %s228, 24
        %s232 = sadd.s32 %s230, %s231
        %s233 = smul.addr %s232, 8
        %s234 = scalar_lea.vmem %s0, %s233
        %s235 = smul.u32 8, %s26
        %s236 = smul.u32 8, %s26
        %p237 = scmp.lt.s32.totalorder %s25, 1
        %s238 = scalar_select %p237, %s25, 1
        %p239 = scmp.lt.s32.totalorder %s236, 7
        %s240 = scalar_select %p239, %s236, 7
        %s241 = smul.addr %s238, 8
        %s242 = sadd.s32 %s240, %s241
        %s243 = scalar_lea.vmem %s1, %s242
        %s244 = smul.u32 8, %s26
        %s245 = smul.u32 8, %s26
        %s246 = smul.u32 8, %s26
        %v247 = vld [vmem:[%s234] sm:$0xff]
        %v248 = vld [vmem:[%s234 + $0x8] sm:$0xff]
        %v249 = vld [vmem:[%s234 + $0x10] sm:$0xff]
        %v250 = vld [vmem:[%s234 + $0x18] sm:$0xff]
        %v251 = vld [vmem:[%s234 + $0x20] sm:$0xff]
        %v252 = vld [vmem:[%s234 + $0x28] sm:$0xff]
        %v253 = vld [vmem:[%s234 + $0x30] sm:$0xff]
        %v254 = vld [vmem:[%s234 + $0x38] sm:$0xff]
        %v255 = vld [vmem:[%s234 + $0x40] sm:$0xff]
        %v256 = vld [vmem:[%s234 + $0x48] sm:$0xff]
        %v257 = vld [vmem:[%s234 + $0x50] sm:$0xff]
        %v258 = vld [vmem:[%s234 + $0x58] sm:$0xff]
        %v259 = vld [vmem:[%s234 + $0x60] sm:$0xff]
        %v260 = vld [vmem:[%s234 + $0x68] sm:$0xff]
        %v261 = vld [vmem:[%s234 + $0x70] sm:$0xff]
        %v262 = vld [vmem:[%s234 + $0x78] sm:$0xff]
        %v263 = vld [vmem:[%s234 + $0x80] sm:$0x7]
        %v264 = vld [vmem:[%s234 + $0x88] sm:$0x7]
        %v265 = vld [vmem:[%s234 + $0x90] sm:$0x7]
        %v266 = vld [vmem:[%s234 + $0x98] sm:$0x7]
        %v267 = vld [vmem:[%s234 + $0xa0] sm:$0x7]
        %v268 = vld [vmem:[%s234 + $0xa8] sm:$0x7]
        %v269 = vld [vmem:[%s234 + $0xb0] sm:$0x7]
        %v270 = vld [vmem:[%s234 + $0xb8] sm:$0x7]
        %v271 = vld [vmem:[%s243] sm:$0xff]
        %vm272 = vcmp.ne.s32.totalorder %v271, 255
        %v273 = vsel %vm272, %v271, 0
        %v274 = vmax.f32 %v247, %v255
        %vm275 = vcmask 1042432
        %v276 = vsel %vm275, %v263, -inf
        %v277 = vmax.f32 %v274, %v276
        %v278 = vrot.slane %v277, 4
        %v279 = vmax.f32 %v277, %v278
        %v280 = vrot.slane %v279, 2
        %v281 = vmax.f32 %v279, %v280
        %v282 = vrot.slane %v281, 1
        %v283 = vmax.f32 %v281, %v282
        %v284 = vmax.f32 %v248, %v256
        %v285 = vsel %vm275, %v264, -inf
        %v286 = vmax.f32 %v284, %v285
        %v287 = vrot.slane %v286, 4
        %v288 = vmax.f32 %v286, %v287
        %v289 = vrot.slane %v288, 2
        %v290 = vmax.f32 %v288, %v289
        %v291 = vrot.slane %v290, 1
        %v292 = vmax.f32 %v290, %v291
        %v293 = vmax.f32 %v249, %v257
        %v294 = vsel %vm275, %v265, -inf
        %v295 = vmax.f32 %v293, %v294
        %v296 = vrot.slane %v295, 4
        %v297 = vmax.f32 %v295, %v296
        %v298 = vrot.slane %v297, 2
        %v299 = vmax.f32 %v297, %v298
        %v300 = vrot.slane %v299, 1
        %v301 = vmax.f32 %v299, %v300
        %v302 = vmax.f32 %v250, %v258
        %v303 = vsel %vm275, %v266, -inf
        %v304 = vmax.f32 %v302, %v303
        %v305 = vrot.slane %v304, 4
        %v306 = vmax.f32 %v304, %v305
        %v307 = vrot.slane %v306, 2
        %v308 = vmax.f32 %v306, %v307
        %v309 = vrot.slane %v308, 1
        %v310 = vmax.f32 %v308, %v309
        %v311 = vmax.f32 %v251, %v259
        %v312 = vsel %vm275, %v267, -inf
        %v313 = vmax.f32 %v311, %v312
        %v314 = vrot.slane %v313, 4
        %v315 = vmax.f32 %v313, %v314
        %v316 = vrot.slane %v315, 2
        %v317 = vmax.f32 %v315, %v316
        %v318 = vrot.slane %v317, 1
        %v319 = vmax.f32 %v317, %v318
        %v320 = vmax.f32 %v252, %v260
        %v321 = vsel %vm275, %v268, -inf
        %v322 = vmax.f32 %v320, %v321
        %v323 = vrot.slane %v322, 4
        %v324 = vmax.f32 %v322, %v323
        %v325 = vrot.slane %v324, 2
        %v326 = vmax.f32 %v324, %v325
        %v327 = vrot.slane %v326, 1
        %v328 = vmax.f32 %v326, %v327
        %v329 = vmax.f32 %v253, %v261
        %v330 = vsel %vm275, %v269, -inf
        %v331 = vmax.f32 %v329, %v330
        %v332 = vrot.slane %v331, 4
        %v333 = vmax.f32 %v331, %v332
        %v334 = vrot.slane %v333, 2
        %v335 = vmax.f32 %v333, %v334
        %v336 = vrot.slane %v335, 1
        %v337 = vmax.f32 %v335, %v336
        %v338 = vmax.f32 %v254, %v262
        %v339 = vsel %vm275, %v270, -inf
        %v340 = vmax.f32 %v338, %v339
        %v341 = vrot.slane %v340, 4
        %v342 = vmax.f32 %v340, %v341
        %v343 = vrot.slane %v342, 2
        %v344 = vmax.f32 %v342, %v343
        %v345 = vrot.slane %v344, 1
        %v346 = vmax.f32 %v344, %v345
        %v347 = vsub.f32 %v247, %v283
        %v348 = vsub.f32 %v248, %v292
        %v349 = vsub.f32 %v249, %v301
        %v350 = vsub.f32 %v250, %v310
        %v351 = vsub.f32 %v251, %v319
        %v352 = vsub.f32 %v252, %v328
        %v353 = vsub.f32 %v253, %v337
        %v354 = vsub.f32 %v254, %v346
        %v355 = vsub.f32 %v255, %v283
        %v356 = vsub.f32 %v256, %v292
        %v357 = vsub.f32 %v257, %v301
        %v358 = vsub.f32 %v258, %v310
        %v359 = vsub.f32 %v259, %v319
        %v360 = vsub.f32 %v260, %v328
        %v361 = vsub.f32 %v261, %v337
        %v362 = vsub.f32 %v262, %v346
        %v363 = vsub.f32 %v263, %v283
        %v364 = vsub.f32 %v264, %v292
        %v365 = vsub.f32 %v265, %v301
        %v366 = vsub.f32 %v266, %v310
        %v367 = vsub.f32 %v267, %v319
        %v368 = vsub.f32 %v268, %v328
        %v369 = vsub.f32 %v269, %v337
        %v370 = vsub.f32 %v270, %v346
        %v371 = vmul.f32 %v347, 1.442695
        %v372 = vpow.pop %v371
        %v373 = vmul.f32 %v348, 1.442695
        %v374 = vpow.pop %v373
        %v375 = vmul.f32 %v349, 1.442695
        %v376 = vpow.pop %v375
        %v377 = vmul.f32 %v350, 1.442695
        %v378 = vpow.pop %v377
        %v379 = vmul.f32 %v351, 1.442695
        %v380 = vpow.pop %v379
        %v381 = vmul.f32 %v352, 1.442695
        %v382 = vpow.pop %v381
        %v383 = vmul.f32 %v353, 1.442695
        %v384 = vpow.pop %v383
        %v385 = vmul.f32 %v354, 1.442695
        %v386 = vpow.pop %v385
        %v387 = vmul.f32 %v355, 1.442695
        %v388 = vpow.pop %v387
        %v389 = vmul.f32 %v356, 1.442695
        %v390 = vpow.pop %v389
        %v391 = vmul.f32 %v357, 1.442695
        %v392 = vpow.pop %v391
        %v393 = vmul.f32 %v358, 1.442695
        %v394 = vpow.pop %v393
        %v395 = vmul.f32 %v359, 1.442695
        %v396 = vpow.pop %v395
        %v397 = vmul.f32 %v360, 1.442695
        %v398 = vpow.pop %v397
        %v399 = vmul.f32 %v361, 1.442695
        %v400 = vpow.pop %v399
        %v401 = vmul.f32 %v362, 1.442695
        %v402 = vpow.pop %v401
        %v403 = vmul.f32 %v363, 1.442695
        %v404 = vpow.pop %v403
        %v405 = vmul.f32 %v364, 1.442695
        %v406 = vpow.pop %v405
        %v407 = vmul.f32 %v365, 1.442695
        %v408 = vpow.pop %v407
        %v409 = vmul.f32 %v366, 1.442695
        %v410 = vpow.pop %v409
        %v411 = vmul.f32 %v367, 1.442695
        %v412 = vpow.pop %v411
        %v413 = vmul.f32 %v368, 1.442695
        %v414 = vpow.pop %v413
        %v415 = vmul.f32 %v369, 1.442695
        %v416 = vpow.pop %v415
        %v417 = vmul.f32 %v370, 1.442695
        %v418 = vpow.pop %v417
        %v419 = vadd.f32 %v372, %v388
        %v420 = vsel %vm275, %v404, 0.0
        %v421 = vadd.f32 %v419, %v420
        %v422 = vrot.slane %v421, 4
        %v423 = vadd.f32 %v421, %v422
        %v424 = vrot.slane %v423, 2
        %v425 = vadd.f32 %v423, %v424
        %v426 = vrot.slane %v425, 1
        %v427 = vadd.f32 %v425, %v426
        %v428 = vadd.f32 %v374, %v390
        %v429 = vsel %vm275, %v406, 0.0
        %v430 = vadd.f32 %v428, %v429
        %v431 = vrot.slane %v430, 4
        %v432 = vadd.f32 %v430, %v431
        %v433 = vrot.slane %v432, 2
        %v434 = vadd.f32 %v432, %v433
        %v435 = vrot.slane %v434, 1
        %v436 = vadd.f32 %v434, %v435
        %v437 = vadd.f32 %v376, %v392
        %v438 = vsel %vm275, %v408, 0.0
        %v439 = vadd.f32 %v437, %v438
        %v440 = vrot.slane %v439, 4
        %v441 = vadd.f32 %v439, %v440
        %v442 = vrot.slane %v441, 2
        %v443 = vadd.f32 %v441, %v442
        %v444 = vrot.slane %v443, 1
        %v445 = vadd.f32 %v443, %v444
        %v446 = vadd.f32 %v378, %v394
        %v447 = vsel %vm275, %v410, 0.0
        %v448 = vadd.f32 %v446, %v447
        %v449 = vrot.slane %v448, 4
        %v450 = vadd.f32 %v448, %v449
        %v451 = vrot.slane %v450, 2
        %v452 = vadd.f32 %v450, %v451
        %v453 = vrot.slane %v452, 1
        %v454 = vadd.f32 %v452, %v453
        %v455 = vadd.f32 %v380, %v396
        %v456 = vsel %vm275, %v412, 0.0
        %v457 = vadd.f32 %v455, %v456
        %v458 = vrot.slane %v457, 4
        %v459 = vadd.f32 %v457, %v458
        %v460 = vrot.slane %v459, 2
        %v461 = vadd.f32 %v459, %v460
        %v462 = vrot.slane %v461, 1
        %v463 = vadd.f32 %v461, %v462
        %v464 = vadd.f32 %v382, %v398
        %v465 = vsel %vm275, %v414, 0.0
        %v466 = vadd.f32 %v464, %v465
        %v467 = vrot.slane %v466, 4
        %v468 = vadd.f32 %v466, %v467
        %v469 = vrot.slane %v468, 2
        %v470 = vadd.f32 %v468, %v469
        %v471 = vrot.slane %v470, 1
        %v472 = vadd.f32 %v470, %v471
        %v473 = vadd.f32 %v384, %v400
        %v474 = vsel %vm275, %v416, 0.0
        %v475 = vadd.f32 %v473, %v474
        %v476 = vrot.slane %v475, 4
        %v477 = vadd.f32 %v475, %v476
        %v478 = vrot.slane %v477, 2
        %v479 = vadd.f32 %v477, %v478
        %v480 = vrot.slane %v479, 1
        %v481 = vadd.f32 %v479, %v480
        %v482 = vadd.f32 %v386, %v402
        %v483 = vsel %vm275, %v418, 0.0
        %v484 = vadd.f32 %v482, %v483
        %v485 = vrot.slane %v484, 4
        %v486 = vadd.f32 %v484, %v485
        %v487 = vrot.slane %v486, 2
        %v488 = vadd.f32 %v486, %v487
        %v489 = vrot.slane %v488, 1
        %v490 = vadd.f32 %v488, %v489
        %v491 = vlog2.pop %v427
        %v492 = vmul.f32 %v491, 0.6931472
        %v493 = vlog2.pop %v436
        %v494 = vmul.f32 %v493, 0.6931472
        %v495 = vlog2.pop %v445
        %v496 = vmul.f32 %v495, 0.6931472
        %v497 = vlog2.pop %v454
        %v498 = vmul.f32 %v497, 0.6931472
        %v499 = vlog2.pop %v463
        %v500 = vmul.f32 %v499, 0.6931472
        %v501 = vlog2.pop %v472
        %v502 = vmul.f32 %v501, 0.6931472
        %v503 = vlog2.pop %v481
        %v504 = vmul.f32 %v503, 0.6931472
        %v505 = vlog2.pop %v490
        %v506 = vmul.f32 %v505, 0.6931472
        %v507 = vadd.f32 %v283, %v492
        %v508 = vadd.f32 %v292, %v494
        %v509 = vadd.f32 %v301, %v496
        %v510 = vadd.f32 %v310, %v498
        %v511 = vadd.f32 %v319, %v500
        %v512 = vadd.f32 %v328, %v502
        %v513 = vadd.f32 %v337, %v504
        %v514 = vadd.f32 %v346, %v506
        %v515 = vlaneseq
        %v516 = vshrl.u32 %v515, 7
        %v517 = vadd.s32 %v516, 8
        %v518 = vadd.s32 %v516, 16
        %v519 = vlaneseq
        %v520 = vshrl.u32 %v519, 7
        %v521 = vsub.s32 0, %v520
        %v522 = vrot.slane %v273, %v521
        %v523 = vlaneseq
        %v524 = vshrl.u32 %v523, 7
        %v525 = vsub.s32 1, %v524
        %v526 = vrot.slane %v273, %v525
        %v527 = vlaneseq
        %v528 = vshrl.u32 %v527, 7
        %v529 = vsub.s32 2, %v528
        %v530 = vrot.slane %v273, %v529
        %v531 = vlaneseq
        %v532 = vshrl.u32 %v531, 7
        %v533 = vsub.s32 3, %v532
        %v534 = vrot.slane %v273, %v533
        %v535 = vlaneseq
        %v536 = vshrl.u32 %v535, 7
        %v537 = vsub.s32 4, %v536
        %v538 = vrot.slane %v273, %v537
        %v539 = vlaneseq
        %v540 = vshrl.u32 %v539, 7
        %v541 = vsub.s32 5, %v540
        %v542 = vrot.slane %v273, %v541
        %v543 = vlaneseq
        %v544 = vshrl.u32 %v543, 7
        %v545 = vsub.s32 6, %v544
        %v546 = vrot.slane %v273, %v545
        %v547 = vlaneseq
        %v548 = vshrl.u32 %v547, 7
        %v549 = vsub.s32 7, %v548
        %v550 = vrot.slane %v273, %v549
        %vm551 = vcmp.eq.s32.totalorder %v516, %v522
        %vm552 = vcmp.eq.s32.totalorder %v516, %v526
        %vm553 = vcmp.eq.s32.totalorder %v516, %v530
        %vm554 = vcmp.eq.s32.totalorder %v516, %v534
        %vm555 = vcmp.eq.s32.totalorder %v516, %v538
        %vm556 = vcmp.eq.s32.totalorder %v516, %v542
        %vm557 = vcmp.eq.s32.totalorder %v516, %v546
        %vm558 = vcmp.eq.s32.totalorder %v516, %v550
        %vm559 = vcmp.eq.s32.totalorder %v517, %v522
        %vm560 = vcmp.eq.s32.totalorder %v517, %v526
        %vm561 = vcmp.eq.s32.totalorder %v517, %v530
        %vm562 = vcmp.eq.s32.totalorder %v517, %v534
        %vm563 = vcmp.eq.s32.totalorder %v517, %v538
        %vm564 = vcmp.eq.s32.totalorder %v517, %v542
        %vm565 = vcmp.eq.s32.totalorder %v517, %v546
        %vm566 = vcmp.eq.s32.totalorder %v517, %v550
        %vm567 = vcmp.eq.s32.totalorder %v518, %v522
        %vm568 = vcmp.eq.s32.totalorder %v518, %v526
        %vm569 = vcmp.eq.s32.totalorder %v518, %v530
        %vm570 = vcmp.eq.s32.totalorder %v518, %v534
        %vm571 = vcmp.eq.s32.totalorder %v518, %v538
        %vm572 = vcmp.eq.s32.totalorder %v518, %v542
        %vm573 = vcmp.eq.s32.totalorder %v518, %v546
        %vm574 = vcmp.eq.s32.totalorder %v518, %v550
        %v575 = vsel %vm551, %v247, 0.0
        %v576 = vsel %vm552, %v248, 0.0
        %v577 = vsel %vm553, %v249, 0.0
        %v578 = vsel %vm554, %v250, 0.0
        %v579 = vsel %vm555, %v251, 0.0
        %v580 = vsel %vm556, %v252, 0.0
        %v581 = vsel %vm557, %v253, 0.0
        %v582 = vsel %vm558, %v254, 0.0
        %v583 = vsel %vm559, %v255, 0.0
        %v584 = vsel %vm560, %v256, 0.0
        %v585 = vsel %vm561, %v257, 0.0
        %v586 = vsel %vm562, %v258, 0.0
        %v587 = vsel %vm563, %v259, 0.0
        %v588 = vsel %vm564, %v260, 0.0
        %v589 = vsel %vm565, %v261, 0.0
        %v590 = vsel %vm566, %v262, 0.0
        %v591 = vsel %vm567, %v263, 0.0
        %v592 = vsel %vm568, %v264, 0.0
        %v593 = vsel %vm569, %v265, 0.0
        %v594 = vsel %vm570, %v266, 0.0
        %v595 = vsel %vm571, %v267, 0.0
        %v596 = vsel %vm572, %v268, 0.0
        %v597 = vsel %vm573, %v269, 0.0
        %v598 = vsel %vm574, %v270, 0.0
        %v599 = vadd.f32 %v575, %v583
        %v600 = vsel %vm275, %v591, 0.0
        %v601 = vadd.f32 %v599, %v600
        %v602 = vrot.slane %v601, 4
        %v603 = vadd.f32 %v601, %v602
        %v604 = vrot.slane %v603, 2
        %v605 = vadd.f32 %v603, %v604
        %v606 = vrot.slane %v605, 1
        %v607 = vadd.f32 %v605, %v606
        %v608 = vadd.f32 %v576, %v584
        %v609 = vsel %vm275, %v592, 0.0
        %v610 = vadd.f32 %v608, %v609
        %v611 = vrot.slane %v610, 4
        %v612 = vadd.f32 %v610, %v611
        %v613 = vrot.slane %v612, 2
        %v614 = vadd.f32 %v612, %v613
        %v615 = vrot.slane %v614, 1
        %v616 = vadd.f32 %v614, %v615
        %v617 = vadd.f32 %v577, %v585
        %v618 = vsel %vm275, %v593, 0.0
        %v619 = vadd.f32 %v617, %v618
        %v620 = vrot.slane %v619, 4
        %v621 = vadd.f32 %v619, %v620
        %v622 = vrot.slane %v621, 2
        %v623 = vadd.f32 %v621, %v622
        %v624 = vrot.slane %v623, 1
        %v625 = vadd.f32 %v623, %v624
        %v626 = vadd.f32 %v578, %v586
        %v627 = vsel %vm275, %v594, 0.0
        %v628 = vadd.f32 %v626, %v627
        %v629 = vrot.slane %v628, 4
        %v630 = vadd.f32 %v628, %v629
        %v631 = vrot.slane %v630, 2
        %v632 = vadd.f32 %v630, %v631
        %v633 = vrot.slane %v632, 1
        %v634 = vadd.f32 %v632, %v633
        %v635 = vadd.f32 %v579, %v587
        %v636 = vsel %vm275, %v595, 0.0
        %v637 = vadd.f32 %v635, %v636
        %v638 = vrot.slane %v637, 4
        %v639 = vadd.f32 %v637, %v638
        %v640 = vrot.slane %v639, 2
        %v641 = vadd.f32 %v639, %v640
        %v642 = vrot.slane %v641, 1
        %v643 = vadd.f32 %v641, %v642
        %v644 = vadd.f32 %v580, %v588
        %v645 = vsel %vm275, %v596, 0.0
        %v646 = vadd.f32 %v644, %v645
        %v647 = vrot.slane %v646, 4
        %v648 = vadd.f32 %v646, %v647
        %v649 = vrot.slane %v648, 2
        %v650 = vadd.f32 %v648, %v649
        %v651 = vrot.slane %v650, 1
        %v652 = vadd.f32 %v650, %v651
        %v653 = vadd.f32 %v581, %v589
        %v654 = vsel %vm275, %v597, 0.0
        %v655 = vadd.f32 %v653, %v654
        %v656 = vrot.slane %v655, 4
        %v657 = vadd.f32 %v655, %v656
        %v658 = vrot.slane %v657, 2
        %v659 = vadd.f32 %v657, %v658
        %v660 = vrot.slane %v659, 1
        %v661 = vadd.f32 %v659, %v660
        %v662 = vadd.f32 %v582, %v590
        %v663 = vsel %vm275, %v598, 0.0
        %v664 = vadd.f32 %v662, %v663
        %v665 = vrot.slane %v664, 4
        %v666 = vadd.f32 %v664, %v665
        %v667 = vrot.slane %v666, 2
        %v668 = vadd.f32 %v666, %v667
        %v669 = vrot.slane %v668, 1
        %v670 = vadd.f32 %v668, %v669
        %v671 = vsub.f32 %v607, %v507
        %v672 = vsub.f32 %v616, %v508
        %v673 = vsub.f32 %v625, %v509
        %v674 = vsub.f32 %v634, %v510
        %v675 = vsub.f32 %v643, %v511
        %v676 = vsub.f32 %v652, %v512
        %v677 = vsub.f32 %v661, %v513
        %v678 = vsub.f32 %v670, %v514
        %v679 = vmul.f32 %v671, 1.442695
        %v680 = vpow.pop %v679
        %v681 = vmul.f32 %v672, 1.442695
        %v682 = vpow.pop %v681
        %v683 = vmul.f32 %v673, 1.442695
        %v684 = vpow.pop %v683
        %v685 = vmul.f32 %v674, 1.442695
        %v686 = vpow.pop %v685
        %v687 = vmul.f32 %v675, 1.442695
        %v688 = vpow.pop %v687
        %v689 = vmul.f32 %v676, 1.442695
        %v690 = vpow.pop %v689
        %v691 = vmul.f32 %v677, 1.442695
        %v692 = vpow.pop %v691
        %v693 = vmul.f32 %v678, 1.442695
        %v694 = vpow.pop %v693
        %v695 = vsub.f32 %v507, %v607
        %v696 = vsub.f32 %v508, %v616
        %v697 = vsub.f32 %v509, %v625
        %v698 = vsub.f32 %v510, %v634
        %v699 = vsub.f32 %v511, %v643
        %v700 = vsub.f32 %v512, %v652
        %v701 = vsub.f32 %v513, %v661
        %v702 = vsub.f32 %v514, %v670
        %v711 = vcombine.low %v680, %v682
        %v712 = vcombine.low %v684, %v686
        %v713 = vcombine.low %v688, %v690
        %v714 = vcombine.low %v692, %v694
        %v716 = vunpack.c.l.s4 1966171168
        %v717 = vunpack.c.0.s8 %v716
        %v718 = vlaneseq
        %v719 = vshrl.u32 %v718, 7
        %v720 = vsub.s32 %v717, %v719
        %v721 = vrot.slane %v711, %v720
        %v723 = vunpack.c.l.s4 1966171168
        %v724 = vunpack.c.0.s8 %v723
        %v725 = vlaneseq
        %v726 = vshrl.u32 %v725, 7
        %v727 = vsub.s32 %v724, %v726
        %v728 = vrot.slane %v712, %v727
        %v730 = vunpack.c.l.s4 1966171168
        %v731 = vunpack.c.0.s8 %v730
        %v732 = vlaneseq
        %v733 = vshrl.u32 %v732, 7
        %v734 = vsub.s32 %v731, %v733
        %v735 = vrot.slane %v713, %v734
        %v737 = vunpack.c.l.s4 1966171168
        %v738 = vunpack.c.0.s8 %v737
        %v739 = vlaneseq
        %v740 = vshrl.u32 %v739, 7
        %v741 = vsub.s32 %v738, %v740
        %v742 = vrot.slane %v714, %v741
        %v743 = vcombine.low %v721, %v728
        %v744 = vcombine.low %v735, %v742
        %v746 = vunpack.c.l.s4 1966171168
        %v747 = vunpack.c.0.s8 %v746
        %v748 = vlaneseq
        %v749 = vshrl.u32 %v748, 7
        %v750 = vsub.s32 %v747, %v749
        %v751 = vrot.slane %v743, %v750
        %v753 = vunpack.c.l.s4 1966171168
        %v754 = vunpack.c.0.s8 %v753
        %v755 = vlaneseq
        %v756 = vshrl.u32 %v755, 7
        %v757 = vsub.s32 %v754, %v756
        %v758 = vrot.slane %v744, %v757
        %v759 = vcombine.low %v751, %v758
        %v761 = vsel %vm272, %v759, 2.0
        %762 = vst [vmem:[%s218] sm:$0xff] %v761
        %v771 = vcombine.low %v695, %v696
        %v772 = vcombine.low %v697, %v698
        %v773 = vcombine.low %v699, %v700
        %v774 = vcombine.low %v701, %v702
        %v776 = vunpack.c.l.s4 1966171168
        %v777 = vunpack.c.0.s8 %v776
        %v778 = vlaneseq
        %v779 = vshrl.u32 %v778, 7
        %v780 = vsub.s32 %v777, %v779
        %v781 = vrot.slane %v771, %v780
        %v783 = vunpack.c.l.s4 1966171168
        %v784 = vunpack.c.0.s8 %v783
        %v785 = vlaneseq
        %v786 = vshrl.u32 %v785, 7
        %v787 = vsub.s32 %v784, %v786
        %v788 = vrot.slane %v772, %v787
        %v790 = vunpack.c.l.s4 1966171168
        %v791 = vunpack.c.0.s8 %v790
        %v792 = vlaneseq
        %v793 = vshrl.u32 %v792, 7
        %v794 = vsub.s32 %v791, %v793
        %v795 = vrot.slane %v773, %v794
        %v797 = vunpack.c.l.s4 1966171168
        %v798 = vunpack.c.0.s8 %v797
        %v799 = vlaneseq
        %v800 = vshrl.u32 %v799, 7
        %v801 = vsub.s32 %v798, %v800
        %v802 = vrot.slane %v774, %v801
        %v803 = vcombine.low %v781, %v788
        %v804 = vcombine.low %v795, %v802
        %v806 = vunpack.c.l.s4 1966171168
        %v807 = vunpack.c.0.s8 %v806
        %v808 = vlaneseq
        %v809 = vshrl.u32 %v808, 7
        %v810 = vsub.s32 %v807, %v809
        %v811 = vrot.slane %v803, %v810
        %v813 = vunpack.c.l.s4 1966171168
        %v814 = vunpack.c.0.s8 %v813
        %v815 = vlaneseq
        %v816 = vshrl.u32 %v815, 7
        %v817 = vsub.s32 %v814, %v816
        %v818 = vrot.slane %v804, %v817
        %v819 = vcombine.low %v811, %v818
        %v821 = vsel %vm272, %v819, 0.0
        %822 = vst [vmem:[%s225] sm:$0xff] %v821
        %s823 = sand.u32 %s99, 1
        %s824 = scalar_lea.sflag [#allocation3], %s823
        %s825 = sand.u32 %s99, 1
        %s826 = smul.addr %s825, 8
        %s827 = scalar_lea.vmem [#allocation2], %s826
        %s828 = sand.u32 %s127, 1
        %s829 = scalar_lea.sflag [#allocation5], %s828
        %s830 = sand.u32 %s127, 1
        %s831 = smul.addr %s830, 8
        %s832 = scalar_lea.vmem [#allocation4], %s831
        // Predicated region
        $region29: #{tpu_custom_call.1} parent=27 // pred_check
          %p833 = pneg %p109
        $region30: #{tpu_custom_call.1} parent=27 // pred_check_branch
          %835 = sbr.rel (%p833) target = $region32
        $region31: #{tpu_custom_call.1} parent=27 // pred_region
          %s836 = smul.u32 8, %s26
          %s838 = ssub.s32 128, 128
          %839 = vsyncadd %s824, %s838
          %s840 = smul.addr %s25, 8
          %s841 = sadd.s32 %s836, %s840
          %s842 = smul.addr %s841, 16
          %s843 = scalar_lea.hbm %s2, %s842
          %s845 = sshll.u32 %s827, 4
          %s846 = int_to_ptr.vmem [resolvable:$true] %s845
          %848 = dma.vmem_to_hbm [thread:$0]  %s846, 128, %s843, %s824
        $region32: #{tpu_custom_call.1} parent=27 // pred_fallthru
          _
        // Predicated region
        $region33: #{tpu_custom_call.1} parent=27 // pred_check
          %p849 = pneg %p137
        $region34: #{tpu_custom_call.1} parent=27 // pred_check_branch
          %851 = sbr.rel (%p849) target = $region36
        $region35: #{tpu_custom_call.1} parent=27 // pred_region
          %s852 = smul.u32 8, %s26
          %s854 = ssub.s32 128, 128
          %855 = vsyncadd %s829, %s854
          %s856 = smul.addr %s25, 8
          %s857 = sadd.s32 %s852, %s856
          %s858 = smul.addr %s857, 16
          %s859 = scalar_lea.hbm %s3, %s858
          %s861 = sshll.u32 %s832, 4
          %s862 = int_to_ptr.vmem [resolvable:$true] %s861
          %864 = dma.vmem_to_hbm [thread:$0]  %s862, 128, %s859, %s829
        $region36: #{tpu_custom_call.1} parent=27 // pred_fallthru
          _
      $region28: #{tpu_custom_call.1} parent=5 // pred_fallthru
        _
      %p865 = scmp.le.s32.totalorder 2, %s16
      // Predicated region
      $region37: #{tpu_custom_call.1} parent=5 // pred_check
        %p866 = pneg %p865
      $region38: #{tpu_custom_call.1} parent=5 // pred_check_branch
        %868 = sbr.rel (%p866) target = $region40
      $region39: #{tpu_custom_call.1} parent=5 // pred_region
        %s869 = ssub.s32 %s16, 2
        // Predicated region
        $region41: #{tpu_custom_call.1} parent=39 // pred_check
          %p870 = pneg %p115
        $region42: #{tpu_custom_call.1} parent=39 // pred_check_branch
          %872 = sbr.rel (%p870) target = $region44
        $region43: #{tpu_custom_call.1} parent=39 // pred_region
          %s873 = sand.u32 %s100, 1
          %s874 = scalar_lea.sflag [#allocation3], %s873
          %s875 = sand.u32 %s100, 1
          %s876 = smul.addr %s875, 8
          %s877 = scalar_lea.vmem [#allocation2], %s876
          %878 = dma.done %s874, 128
        $region44: #{tpu_custom_call.1} parent=39 // pred_fallthru
          _
        // Predicated region
        $region45: #{tpu_custom_call.1} parent=39 // pred_check
          %p879 = pneg %p143
        $region46: #{tpu_custom_call.1} parent=39 // pred_check_branch
          %881 = sbr.rel (%p879) target = $region48
        $region47: #{tpu_custom_call.1} parent=39 // pred_region
          %s882 = sand.u32 %s128, 1
          %s883 = scalar_lea.sflag [#allocation5], %s882
          %s884 = sand.u32 %s128, 1
          %s885 = smul.addr %s884, 8
          %s886 = scalar_lea.vmem [#allocation4], %s885
          %887 = dma.done %s883, 128
        $region48: #{tpu_custom_call.1} parent=39 // pred_fallthru
          _
      $region40: #{tpu_custom_call.1} parent=5 // pred_fallthru
        _
    $region6: #{tpu_custom_call.1} parent=1 // loop_footer
      %s20 = sadd.s32 1, %s16
    $region7: #{tpu_custom_call.1} parent=1 // loop_footer_branch
      %15 = sbr.rel target = $region3
    $region8: #{tpu_custom_call.1} parent=1 // loop_exit
      _
    %888 = vsyncpa [#allocation3], 1
    %s889 = scalar_lea.sflag [#allocation3], 1
    %890 = vsyncpa %s889, 1
    %891 = vsyncpa [#allocation5], 1
    %s892 = scalar_lea.sflag [#allocation5], 1
    %893 = vsyncpa %s892, 1

</llo_original>
